<compile_context>
chip_gen: v7x
topology: tpu7x:2x2x1
jax: 0.10.0
libtpu: 0.0.40
codegen_flags: <defaults>
</compile_context>

<pallas_src>
import math

import jax
import jax.numpy as jnp
from jax.experimental import pallas as pl
from jax.experimental.pallas import tpu as pltpu

W = 10.0
E = 2.0
INV_E = 1.0 / E
C = W - W * math.log(1.0 + W / E)
ALPHA = 1.0  # unused in the forward pass (kept for parity with the module)

LANES = 128
SUBLANES = 8
ROW_ALIGN = 32                       # sublane-pack safe for f32/bf16/int8 blocks
FAST_PATH_ELEMS = SUBLANES * LANES   # below ~1 vreg-group, XLA fusion wins


def _round_up(x, m):
    return ((x + m - 1) // m) * m


def _wing_terms(x, t):
    """f32 wing-loss terms; shared by the kernel body and the fast path."""
    diff = jnp.where(t == -1.0, 0.0, x - t)          # weight folded into select
    a = jnp.abs(diff)
    return jnp.where(a < W, W * jnp.log1p(a * INV_E), a - C)


def landmarks_loss(pred, truel, mask, *, block_rows=8192, num_splits=1):
    """pred, truel, mask: same shape (any rank). Returns scalar f32 loss.

    num_splits=1 for single-TensorCore chips (v5e/v6e); use 2 on v7x so both
    TensorCores get an independent slice of the reduction.
    """
    assert pred.shape == truel.shape == mask.shape
    n = int(pred.size)

    if mask.dtype == jnp.bool_:
        mask = mask.astype(jnp.int8)      # keep the mask stream at 1 byte/elem

    if n <= FAST_PATH_ELEMS:
        # Tiny inputs (and n == 0): pure-JAX fast path.
        m = mask.astype(jnp.float32)
        y = _wing_terms(pred.astype(jnp.float32) * m,
                        truel.astype(jnp.float32) * m)
        return jnp.sum(y) / (jnp.sum(m) + 1e-13)

    rows = pl.cdiv(n, LANES)
    lane_pad = rows * LANES - n

    def to_lane_dense(a):
        flat = a.reshape(-1)              # free reshape (row-major bitcast)
        if lane_pad:
            # Only remaining copy; < 128 zero elements, loss-neutral
            # (y(0,0) == 0 and the padded mask contributes 0 to the denom).
            flat = jnp.pad(flat, (0, lane_pad))
        return flat.reshape(rows, LANES)

    pred2 = to_lane_dense(pred)
    true2 = to_lane_dense(truel)
    mask2 = to_lane_dense(mask)

    block_cap = max(ROW_ALIGN, _round_up(int(block_rows), ROW_ALIGN))
    if rows <= block_cap:
        block_rows_eff = rows             # full-extent block: always legal
        num_splits_eff = 1
        tiles_per_split = 1
    else:
        block_rows_eff = block_cap
        num_splits_eff = max(1, min(int(num_splits),
                                    pl.cdiv(rows, block_rows_eff)))
        tiles_per_split = pl.cdiv(rows, num_splits_eff * block_rows_eff)

    def kernel(pred_ref, true_ref, mask_ref, loss_ref, msum_ref):
        c = pl.program_id(0)
        i = pl.program_id(1)

        @pl.when(i == 0)
        def _init():
            loss_ref[...] = jnp.zeros_like(loss_ref)
            msum_ref[...] = jnp.zeros_like(msum_ref)

        # Upcast after the load: HBM traffic stays in the caller's dtype.
        m = mask_ref[...].astype(jnp.float32)
        x = pred_ref[...].astype(jnp.float32) * m
        t = true_ref[...].astype(jnp.float32) * m
        y = _wing_terms(x, t)

        # Ragged row tail: rows at/past `rows` are uninitialized block padding.
        row0 = (c * tiles_per_split + i) * block_rows_eff
        ridx = jax.lax.broadcasted_iota(jnp.int32, (block_rows_eff, LANES), 0)
        valid = (ridx + row0) < rows
        y = jnp.where(valid, y, 0.0)
        m = jnp.where(valid, m, 0.0)

        # Per-lane partial sums folded into the resident (1, 128) accumulators.
        loss_ref[0] += jnp.sum(y, axis=0, keepdims=True)
        msum_ref[0] += jnp.sum(m, axis=0, keepdims=True)

    in_spec = pl.BlockSpec(
        (block_rows_eff, LANES),
        lambda c, i, T=tiles_per_split: (c * T + i, 0),
    )
    acc_spec = pl.BlockSpec((1, 1, LANES), lambda c, i: (c, 0, 0))

    block_bytes = sum(a.dtype.itemsize * block_rows_eff * LANES
                      for a in (pred2, true2, mask2))
    vmem_limit = min(100 * 1024 * 1024,
                     max(32 * 1024 * 1024, 2 * block_bytes + (4 << 20)))
    in_bytes = sum(a.size * a.dtype.itemsize for a in (pred2, true2, mask2))

    loss_part, mask_part = pl.pallas_call(
        kernel,
        grid=(num_splits_eff, tiles_per_split),
        in_specs=[in_spec, in_spec, in_spec],
        out_specs=(acc_spec, acc_spec),
        out_shape=(
            jax.ShapeDtypeStruct((num_splits_eff, 1, LANES), jnp.float32),
            jax.ShapeDtypeStruct((num_splits_eff, 1, LANES), jnp.float32),
        ),
        compiler_params=pltpu.CompilerParams(
            dimension_semantics=("parallel", "arbitrary"),
            vmem_limit_bytes=int(vmem_limit),
        ),
        cost_estimate=pl.CostEstimate(
            flops=15 * rows * LANES,
            transcendentals=rows * LANES,
            bytes_accessed=int(in_bytes + 2 * 4 * num_splits_eff * LANES),
        ),
    )(pred2, true2, mask2)

    # Final tiny reduce + the single divide (sum(mask) + 1e-13 normalization).
    return jnp.sum(loss_part) / (jnp.sum(mask_part) + 1e-13)


def _reference(pred, truel, mask):
    """Pure-JAX mirror of the PyTorch module (f32 math), for sanity checks."""
    pred = pred.astype(jnp.float32)
    truel = truel.astype(jnp.float32)
    mask = mask.astype(jnp.float32)
    c = W - W * jnp.log(1.0 + W / E)
    x = pred * mask
    t = truel * mask
    weight = jnp.where(t == -1.0, 0.0, 1.0)
    diff = weight * (x - t)
    a = jnp.abs(diff)
    flag = (a < W).astype(jnp.float32)
    y = flag * W * jnp.log(1.0 + a / E) + (1.0 - flag) * (a - c)
    return jnp.sum(y) / (jnp.sum(mask) + 1e-13)


def _make_case(key, shape, dtype, mask_dtype):
    kp, kt, km = jax.random.split(key, 3)
    pred = (jax.random.normal(kp, shape, jnp.float32) * 3.0).astype(dtype)
    truel = (jax.random.normal(kt, shape, jnp.float32) * 2.0).astype(dtype)
    mask = (jax.random.uniform(km, shape) > 0.3).astype(mask_dtype)
    # Exercise the large-|diff| wing branch and the (t == -1) zero-weight path.
    pred = pred.at[0, 0].set(jnp.asarray(50.0, dtype))
    mask = mask.at[0, 0].set(jnp.asarray(1, mask_dtype))
    truel = truel.at[1, 1].set(jnp.asarray(-1.0, dtype))
    mask = mask.at[1, 1].set(jnp.asarray(1, mask_dtype))
    return pred, truel, mask


if __name__ == "__main__":
    root = jax.random.PRNGKey(0)
    keys = jax.random.split(root, 6)

    cases = [
        # shape,       dtype,        mask dtype,   kwargs
        ((8, 10),    jnp.float32,  jnp.float32, {}),                                 # tiny: fast path
        ((160, 16),  jnp.float32,  jnp.float32, {}),                                 # 128-aligned: zero-copy, 1 block
        ((123, 10),  jnp.float32,  jnp.float32, {}),                                 # ragged lane tail
        ((300, 10),  jnp.bfloat16, jnp.int8,    {}),                                 # narrow dtypes, in-kernel upcast
        ((640, 16),  jnp.float32,  jnp.float32, dict(block_rows=64, num_splits=2)),  # 2-way leading split (v7x style)
        ((1040, 16), jnp.float32,  jnp.float32, dict(block_rows=32)),                # multi-step accumulation + ragged rows
    ]

    for key, (shape, dtype, mdtype, kwargs) in zip(list(keys), cases):
        pred, truel, mask = _make_case(key, shape, dtype, mdtype)
        out = jax.block_until_ready(landmarks_loss(pred, truel, mask, **kwargs))
        ref = jax.block_until_ready(_reference(pred, truel, mask))
        assert jnp.allclose(out, ref, rtol=2e-5, atol=1e-5), (shape, float(out), float(ref))

    print("KERNEL_OK")
</pallas_src>

<mosaic_0001>
module attributes {stable_mosaic.version = 11 : i64} {
  func.func @kernel(%arg0: i32, %arg1: i32, %arg2: memref<20x128xf32, #tpu.memory_space<vmem>>, %arg3: memref<20x128xf32, #tpu.memory_space<vmem>>, %arg4: memref<20x128xf32, #tpu.memory_space<vmem>>, %arg5: memref<1x1x128xf32, #tpu.memory_space<vmem>>, %arg6: memref<1x1x128xf32, #tpu.memory_space<vmem>>) attributes {dimension_semantics = [#tpu.dimension_semantics<parallel>, #tpu.dimension_semantics<arbitrary>], iteration_bounds = array<i64: 1, 1>, scalar_prefetch = 0 : i64, scratch_operands = 0 : i64, tpu.core_type = #tpu.core_type<tc>, window_params = [{transform_indices = @transform_0, window_bounds = array<i64: 20, 128>}, {transform_indices = @transform_1, window_bounds = array<i64: 20, 128>}, {transform_indices = @transform_2, window_bounds = array<i64: 20, 128>}, {transform_indices = @transform_3, window_bounds = array<i64: 1, 1, 128>}, {transform_indices = @transform_4, window_bounds = array<i64: 1, 1, 128>}]} {
    %c0_i32 = arith.constant 0 : i32
    %0 = arith.cmpi eq, %arg1, %c0_i32 : i32
    %1 = arith.extui %0 : i1 to i32
    %c0_i32_0 = arith.constant 0 : i32
    %2 = arith.cmpi ne, %1, %c0_i32_0 : i32
    scf.if %2 {
      %cst_28 = arith.constant 0.000000e+00 : f32
      %52 = vector.broadcast %cst_28 : f32 to vector<1x1x128xf32>
      %c0_29 = arith.constant 0 : index
      %c0_30 = arith.constant 0 : index
      %c0_31 = arith.constant 0 : index
      %53 = vector.load %arg5[%c0_29, %c0_30, %c0_31] : memref<1x1x128xf32, #tpu.memory_space<vmem>>, vector<1x1x128xf32>
      tpu.vector_store %arg5[%c0_29, %c0_30, %c0_31], %52 {strides = array<i32>} : memref<1x1x128xf32, #tpu.memory_space<vmem>>, vector<1x1x128xf32>,
      %cst_32 = arith.constant 0.000000e+00 : f32
      %54 = vector.broadcast %cst_32 : f32 to vector<1x1x128xf32>
      %c0_33 = arith.constant 0 : index
      %c0_34 = arith.constant 0 : index
      %c0_35 = arith.constant 0 : index
      %55 = vector.load %arg6[%c0_33, %c0_34, %c0_35] : memref<1x1x128xf32, #tpu.memory_space<vmem>>, vector<1x1x128xf32>
      tpu.vector_store %arg6[%c0_33, %c0_34, %c0_35], %54 {strides = array<i32>} : memref<1x1x128xf32, #tpu.memory_space<vmem>>, vector<1x1x128xf32>,
    } else {
    }
    %c0 = arith.constant 0 : index
    %c0_1 = arith.constant 0 : index
    %3 = vector.load %arg4[%c0, %c0_1] : memref<20x128xf32, #tpu.memory_space<vmem>>, vector<20x128xf32>
    %c0_2 = arith.constant 0 : index
    %c0_3 = arith.constant 0 : index
    %4 = vector.load %arg2[%c0_2, %c0_3] : memref<20x128xf32, #tpu.memory_space<vmem>>, vector<20x128xf32>
    %5 = arith.mulf %4, %3 : vector<20x128xf32>
    %c0_4 = arith.constant 0 : index
    %c0_5 = arith.constant 0 : index
    %6 = vector.load %arg3[%c0_4, %c0_5] : memref<20x128xf32, #tpu.memory_space<vmem>>, vector<20x128xf32>
    %7 = arith.mulf %6, %3 : vector<20x128xf32>
    %cst = arith.constant -1.000000e+00 : f32
    %8 = vector.broadcast %cst : f32 to vector<20x128xf32>
    %9 = arith.cmpf oeq, %7, %8 : vector<20x128xf32>
    %10 = arith.subf %5, %7 : vector<20x128xf32>
    %cst_6 = arith.constant 0.000000e+00 : f32
    %11 = vector.broadcast %cst_6 : f32 to vector<20x128xf32>
    %12 = arith.select %9, %11, %10 : vector<20x128xi1>, vector<20x128xf32>
    %13 = math.absf %12 : vector<20x128xf32>
    %cst_7 = arith.constant 1.000000e+01 : f32
    %14 = vector.broadcast %cst_7 : f32 to vector<20x128xf32>
    %15 = arith.cmpf olt, %13, %14 : vector<20x128xf32>
    %cst_8 = arith.constant 5.000000e-01 : f32
    %16 = vector.broadcast %cst_8 : f32 to vector<20x128xf32>
    %17 = arith.mulf %13, %16 : vector<20x128xf32>
    %18 = math.log1p %17 : vector<20x128xf32>
    %cst_9 = arith.constant 1.000000e+01 : f32
    %19 = vector.broadcast %cst_9 : f32 to vector<20x128xf32>
    %20 = arith.mulf %19, %18 : vector<20x128xf32>
    %cst_10 = arith.constant -7.9175949 : f32
    %21 = vector.broadcast %cst_10 : f32 to vector<20x128xf32>
    %22 = arith.subf %13, %21 : vector<20x128xf32>
    %23 = arith.select %15, %20, %22 : vector<20x128xi1>, vector<20x128xf32>
    %c1_i32 = arith.constant 1 : i32
    %24 = arith.muli %arg0, %c1_i32 : i32
    %25 = arith.addi %24, %arg1 : i32
    %c20_i32 = arith.constant 20 : i32
    %26 = arith.muli %25, %c20_i32 : i32
    %27 = tpu.iota {dimensions = array<i32: 0>} : vector<20x128xi32>
    %28 = vector.broadcast %26 : i32 to vector<20x128xi32>
    %29 = arith.addi %27, %28 : vector<20x128xi32>
    %c20_i32_11 = arith.constant 20 : i32
    %30 = vector.broadcast %c20_i32_11 : i32 to vector<20x128xi32>
    %31 = arith.cmpi slt, %29, %30 : vector<20x128xi32>
    %cst_12 = arith.constant 0.000000e+00 : f32
    %32 = vector.broadcast %cst_12 : f32 to vector<20x128xf32>
    %33 = arith.select %31, %23, %32 : vector<20x128xi1>, vector<20x128xf32>
    %cst_13 = arith.constant 0.000000e+00 : f32
    %34 = vector.broadcast %cst_13 : f32 to vector<20x128xf32>
    %35 = arith.select %31, %3, %34 : vector<20x128xi1>, vector<20x128xf32>
    %c0_14 = arith.constant 0 : index
    %c0_15 = arith.constant 0 : index
    %c0_16 = arith.constant 0 : index
    %36 = vector.load %arg5[%c0_14, %c0_15, %c0_16] : memref<1x1x128xf32, #tpu.memory_space<vmem>>, vector<1x1x128xf32>
    %37 = vector.shape_cast %36 : vector<1x1x128xf32> to vector<1x128xf32>
    %cst_17 = arith.constant dense<0.000000e+00> : vector<128xf32>
    %38 = vector.multi_reduction <add>, %33, %cst_17 [0] : vector<20x128xf32> to vector<128xf32>
    %39 = vector.shape_cast %38 : vector<128xf32> to vector<1x128xf32>
    %40 = arith.addf %37, %39 : vector<1x128xf32>
    %c0_18 = arith.constant 0 : index
    %c0_19 = arith.constant 0 : index
    %c0_20 = arith.constant 0 : index
    %41 = vector.load %arg5[%c0_18, %c0_19, %c0_20] : memref<1x1x128xf32, #tpu.memory_space<vmem>>, vector<1x1x128xf32>
    %42 = vector.shape_cast %41 : vector<1x1x128xf32> to vector<1x128xf32>
    %43 = vector.shape_cast %40 : vector<1x128xf32> to vector<1x1x128xf32>
    tpu.vector_store %arg5[%c0_18, %c0_19, %c0_20], %43 {strides = array<i32>} : memref<1x1x128xf32, #tpu.memory_space<vmem>>, vector<1x1x128xf32>,
    %c0_21 = arith.constant 0 : index
    %c0_22 = arith.constant 0 : index
    %c0_23 = arith.constant 0 : index
    %44 = vector.load %arg6[%c0_21, %c0_22, %c0_23] : memref<1x1x128xf32, #tpu.memory_space<vmem>>, vector<1x1x128xf32>
    %45 = vector.shape_cast %44 : vector<1x1x128xf32> to vector<1x128xf32>
    %cst_24 = arith.constant dense<0.000000e+00> : vector<128xf32>
    %46 = vector.multi_reduction <add>, %35, %cst_24 [0] : vector<20x128xf32> to vector<128xf32>
    %47 = vector.shape_cast %46 : vector<128xf32> to vector<1x128xf32>
    %48 = arith.addf %45, %47 : vector<1x128xf32>
    %c0_25 = arith.constant 0 : index
    %c0_26 = arith.constant 0 : index
    %c0_27 = arith.constant 0 : index
    %49 = vector.load %arg6[%c0_25, %c0_26, %c0_27] : memref<1x1x128xf32, #tpu.memory_space<vmem>>, vector<1x1x128xf32>
    %50 = vector.shape_cast %49 : vector<1x1x128xf32> to vector<1x128xf32>
    %51 = vector.shape_cast %48 : vector<1x128xf32> to vector<1x1x128xf32>
    tpu.vector_store %arg6[%c0_25, %c0_26, %c0_27], %51 {strides = array<i32>} : memref<1x1x128xf32, #tpu.memory_space<vmem>>, vector<1x1x128xf32>,
    return
  }
  func.func @transform_0(%arg0: i32, %arg1: i32) -> (i32, i32) {
    %c1_i32 = arith.constant 1 : i32
    %0 = arith.muli %arg0, %c1_i32 : i32
    %1 = arith.addi %0, %arg1 : i32
    %c0_i32 = arith.constant 0 : i32
    %c0_i32_0 = arith.constant 0 : i32
    return %1, %c0_i32 : i32, i32
  }
  func.func @transform_1(%arg0: i32, %arg1: i32) -> (i32, i32) {
    %c1_i32 = arith.constant 1 : i32
    %0 = arith.muli %arg0, %c1_i32 : i32
    %1 = arith.addi %0, %arg1 : i32
    %c0_i32 = arith.constant 0 : i32
    %c0_i32_0 = arith.constant 0 : i32
    return %1, %c0_i32 : i32, i32
  }
  func.func @transform_2(%arg0: i32, %arg1: i32) -> (i32, i32) {
    %c1_i32 = arith.constant 1 : i32
    %0 = arith.muli %arg0, %c1_i32 : i32
    %1 = arith.addi %0, %arg1 : i32
    %c0_i32 = arith.constant 0 : i32
    %c0_i32_0 = arith.constant 0 : i32
    return %1, %c0_i32 : i32, i32
  }
  func.func @transform_3(%arg0: i32, %arg1: i32) -> (i32, i32, i32) {
    %c0_i32 = arith.constant 0 : i32
    %c0_i32_0 = arith.constant 0 : i32
    %c0_i32_1 = arith.constant 0 : i32
    return %arg0, %c0_i32, %c0_i32_0 : i32, i32, i32
  }
  func.func @transform_4(%arg0: i32, %arg1: i32) -> (i32, i32, i32) {
    %c0_i32 = arith.constant 0 : i32
    %c0_i32_0 = arith.constant 0 : i32
    %c0_i32_1 = arith.constant 0 : i32
    return %arg0, %c0_i32, %c0_i32_0 : i32, i32, i32
  }
}

</mosaic_0001>

<llo_original>
// kernel: tpu_custom_call.1
$region0: #{tpu_custom_call.1}
  #allocation0 [shape = 'u32[]', space=smem, size = 0x4, offset = 0x4, fixed_abs, tag = 'smem constant byte address 0x4 - core index']
  #allocation1 [shape = 'u32[144,128]{1,0:T(1,128)}', space=vmem, size = 0x12000, scoped, tag = 'internal scratch']
  %s0 = inlined_call_operand.hbm [shape: f32[20,128], index: 0, kind: input, shape index: {}]
  %s1 = inlined_call_operand.hbm [shape: f32[20,128], index: 1, kind: input, shape index: {}]
  %s2 = inlined_call_operand.hbm [shape: f32[20,128], index: 2, kind: input, shape index: {}]
  %s3 = inlined_call_operand.hbm [shape: f32[1,1,128], index: 3, kind: output, shape index: {0}]
  %s4 = inlined_call_operand.hbm [shape: f32[1,1,128], index: 4, kind: output, shape index: {1}]
  %5 = xla_tuple %s3, %s4
  %s6 = sld [smem:[#allocation0]]
  $region46: #{tpu_custom_call.1} parent=0
    _
  %s8 = ssub.s32 1, %s6
  %s9 = scalar_select 0, %s8, %s6
  $region1: #{tpu_custom_call.1} parent=0
    #allocation2 [shape = 'u8[12288]{0}', space=vmem, size = 0x3000, scoped, tag = 'input window, operand 0, single buffered']
    #allocation3 [shape = 's32[1]{0}', space=sflag, size = 0x4, scoped, tag = 'scoped memory for tpu_custom_call.1']
    #allocation4 [shape = 's32[1]{0}', space=sflag, size = 0x4, scoped, tag = 'scoped memory for tpu_custom_call.1']
    #allocation5 [shape = 'u8[12288]{0}', space=vmem, size = 0x3000, scoped, tag = 'input window, operand 1, single buffered']
    #allocation6 [shape = 's32[1]{0}', space=sflag, size = 0x4, scoped, tag = 'scoped memory for tpu_custom_call.1']
    #allocation7 [shape = 'u8[12288]{0}', space=vmem, size = 0x3000, scoped, tag = 'input window, operand 2, single buffered']
    #allocation8 [shape = 'u8[512]{0}', space=vmem, size = 0x400, scoped, tag = 'output window, operand 0, single buffered']
    #allocation9 [shape = 'u8[512]{0}', space=vmem, size = 0x400, scoped, tag = 'output window, operand 1, single buffered']
    #allocation10 [shape = 's32[1]{0}', space=sflag, size = 0x4, scoped, tag = 'scoped memory for tpu_custom_call.1']
    %10 = vsyncpa [#allocation3], 0
    %11 = vsyncpa [#allocation6], 0
    %12 = vsyncpa [#allocation4], 0
    %13 = vsyncpa [#allocation10], 0
    // Predicated region
    $region2: #{tpu_custom_call.1} parent=1 // pred_check
      _
    $region3: #{tpu_custom_call.1} parent=1 // pred_check_branch
      %15 = sbr.rel (0) target = $region5
    $region4: #{tpu_custom_call.1} parent=1 // pred_region
      %s16 = sadd.s32 0, 0
      %s17 = smul.u32 3, %s16
      %s19 = ssub.s32 384, 384
      %20 = vsyncadd [#allocation3], %s19
      %s21 = smul.addr %s17, 128
      %s22 = scalar_lea.hbm %s0, %s21
      %s23 = sshll.u32 [#allocation2], 4
      %s24 = int_to_ptr.vmem [resolvable:$true] %s23
      %29 = dma.hbm_to_vmem [thread:$0]  %s22, 384, %s24, [#allocation3], 128, 128, 8
    $region5: #{tpu_custom_call.1} parent=1 // pred_fallthru
      _
    // Predicated region
    $region6: #{tpu_custom_call.1} parent=1 // pred_check
      _
    $region7: #{tpu_custom_call.1} parent=1 // pred_check_branch
      %31 = sbr.rel (0) target = $region9
    $region8: #{tpu_custom_call.1} parent=1 // pred_region
      %s32 = sadd.s32 0, 0
      %s33 = smul.u32 3, %s32
      %s35 = ssub.s32 384, 384
      %36 = vsyncadd [#allocation6], %s35
      %s37 = smul.addr %s33, 128
      %s38 = scalar_lea.hbm %s1, %s37
      %s39 = sshll.u32 [#allocation5], 4
      %s40 = int_to_ptr.vmem [resolvable:$true] %s39
      %45 = dma.hbm_to_vmem [thread:$0]  %s38, 384, %s40, [#allocation6], 128, 128, 8
    $region9: #{tpu_custom_call.1} parent=1 // pred_fallthru
      _
    // Predicated region
    $region10: #{tpu_custom_call.1} parent=1 // pred_check
      _
    $region11: #{tpu_custom_call.1} parent=1 // pred_check_branch
      %47 = sbr.rel (0) target = $region13
    $region12: #{tpu_custom_call.1} parent=1 // pred_region
      %s48 = sadd.s32 0, 0
      %s49 = smul.u32 3, %s48
      %s51 = ssub.s32 384, 384
      %52 = vsyncadd [#allocation6], %s51
      %s53 = smul.addr %s49, 128
      %s54 = scalar_lea.hbm %s2, %s53
      %s55 = sshll.u32 [#allocation7], 4
      %s56 = int_to_ptr.vmem [resolvable:$true] %s55
      %61 = dma.hbm_to_vmem [thread:$0]  %s54, 384, %s56, [#allocation6], 128, 128, 8
    $region13: #{tpu_custom_call.1} parent=1 // pred_fallthru
      _
    // Predicated region
    $region14: #{tpu_custom_call.1} parent=1 // pred_check
      _
    $region15: #{tpu_custom_call.1} parent=1 // pred_check_branch
      %63 = sbr.rel (0) target = $region17
    $region16: #{tpu_custom_call.1} parent=1 // pred_region
      %64 = dma.done [#allocation3], 384
    $region17: #{tpu_custom_call.1} parent=1 // pred_fallthru
      _
    // Predicated region
    $region18: #{tpu_custom_call.1} parent=1 // pred_check
      _
    $region19: #{tpu_custom_call.1} parent=1 // pred_check_branch
      %66 = sbr.rel (0) target = $region21
    $region20: #{tpu_custom_call.1} parent=1 // pred_region
      %67 = dma.done [#allocation6], 384
    $region21: #{tpu_custom_call.1} parent=1 // pred_fallthru
      _
    // Predicated region
    $region22: #{tpu_custom_call.1} parent=1 // pred_check
      _
    $region23: #{tpu_custom_call.1} parent=1 // pred_check_branch
      %69 = sbr.rel (0) target = $region25
    $region24: #{tpu_custom_call.1} parent=1 // pred_region
      %70 = dma.done [#allocation6], 384
    $region25: #{tpu_custom_call.1} parent=1 // pred_fallthru
      _
    %s71 = sadd.s32 0, 0
    %s72 = smul.u32 3, %s71
    %s73 = sadd.s32 0, 0
    %s74 = smul.u32 3, %s73
    %s75 = sadd.s32 0, 0
    %s76 = smul.u32 3, %s75
    %p77 = scmp.eq.s32.totalorder 0, 0
    // Predicated region
    $region26: #{tpu_custom_call.1} parent=1 // pred_check
      %p78 = pneg %p77
    $region27: #{tpu_custom_call.1} parent=1 // pred_check_branch
      %80 = sbr.rel (%p78) target = $region29
    $region28: #{tpu_custom_call.1} parent=1 // pred_region
      %81 = vst [vmem:[#allocation8] sm:$0x1] 0.0
      %82 = vst [vmem:[#allocation9] sm:$0x1] 0.0
    $region29: #{tpu_custom_call.1} parent=1 // pred_fallthru
      _
    %v83 = vld [vmem:[#allocation7] sm:$0xff]
    %v84 = vld [vmem:[#allocation7 + $0x8] sm:$0xff]
    %v85 = vld [vmem:[#allocation7 + $0x10] sm:$0xf]
    %v86 = vld [vmem:[#allocation2] sm:$0xff]
    %v87 = vld [vmem:[#allocation2 + $0x8] sm:$0xff]
    %v88 = vld [vmem:[#allocation2 + $0x10] sm:$0xf]
    %v89 = vmul.f32 %v86, %v83
    %v90 = vmul.f32 %v87, %v84
    %v91 = vmul.f32 %v88, %v85
    %v92 = vld [vmem:[#allocation5] sm:$0xff]
    %v93 = vld [vmem:[#allocation5 + $0x8] sm:$0xff]
    %v94 = vld [vmem:[#allocation5 + $0x10] sm:$0xf]
    %v95 = vmul.f32 %v92, %v83
    %v96 = vmul.f32 %v93, %v84
    %v97 = vmul.f32 %v94, %v85
    %vm98 = vcmp.eq.f32.partialorder %v95, -1.0
    %vm99 = vcmp.eq.f32.partialorder %v96, -1.0
    %vm100 = vcmp.eq.f32.partialorder %v97, -1.0
    %v101 = vsub.f32 %v89, %v95
    %v102 = vsub.f32 %v90, %v96
    %v103 = vsub.f32 %v91, %v97
    %v104 = vsel %vm98, 0.0, %v101
    %v105 = vsel %vm99, 0.0, %v102
    %v106 = vsel %vm100, 0.0, %v103
    %v107 = vand.u32 2147483647, %v104
    %v108 = vand.u32 2147483647, %v105
    %v109 = vand.u32 2147483647, %v106
    %vm110 = vcmp.lt.f32.partialorder %v107, 10.0
    %vm111 = vcmp.lt.f32.partialorder %v108, 10.0
    %vm112 = vcmp.lt.f32.partialorder %v109, 10.0
    %v113 = vmul.f32 %v107, 0.5
    %v114 = vmul.f32 %v108, 0.5
    %v115 = vmul.f32 %v109, 0.5
    %v116 = vadd.f32 %v113, 1.0
    %v117 = vlog2.pop %v116
    %v118 = vmul.f32 %v117, 0.6931472
    %v119 = vmul.f32 -0.5, %v113
    %v120 = vadd.f32 %v119, 1.0
    %v121 = vmul.f32 %v120, %v113
    %v122 = vand.u32 2147483647, %v113
    %vm123 = vcmp.lt.f32.partialorder %v122, 0.0004427343
    %v124 = vsel %vm123, %v121, %v118
    %v125 = vadd.f32 %v114, 1.0
    %v126 = vlog2.pop %v125
    %v127 = vmul.f32 %v126, 0.6931472
    %v128 = vmul.f32 -0.5, %v114
    %v129 = vadd.f32 %v128, 1.0
    %v130 = vmul.f32 %v129, %v114
    %v131 = vand.u32 2147483647, %v114
    %vm132 = vcmp.lt.f32.partialorder %v131, 0.0004427343
    %v133 = vsel %vm132, %v130, %v127
    %v134 = vadd.f32 %v115, 1.0
    %v135 = vlog2.pop %v134
    %v136 = vmul.f32 %v135, 0.6931472
    %v137 = vmul.f32 -0.5, %v115
    %v138 = vadd.f32 %v137, 1.0
    %v139 = vmul.f32 %v138, %v115
    %v140 = vand.u32 2147483647, %v115
    %vm141 = vcmp.lt.f32.partialorder %v140, 0.0004427343
    %v142 = vsel %vm141, %v139, %v136
    %v143 = vmul.f32 %v124, 10.0
    %v144 = vmul.f32 %v133, 10.0
    %v145 = vmul.f32 %v142, 10.0
    %v146 = vsub.f32 %v107, -7.917595
    %v147 = vsub.f32 %v108, -7.917595
    %v148 = vsub.f32 %v109, -7.917595
    %v149 = vsel %vm110, %v143, %v146
    %v150 = vsel %vm111, %v144, %v147
    %v151 = vsel %vm112, %v145, %v148
    %s152 = sadd.s32 0, 0
    %s153 = smul.u32 %s152, 20
    %v154 = vlaneseq
    %v155 = vshrl.u32 %v154, 7
    %v156 = vadd.s32 %v155, 8
    %v157 = vadd.s32 %v155, 16
    %v158 = vstv %s153
    %v159 = vadd.s32 %v155, %v158
    %v160 = vadd.s32 %v156, %v158
    %v161 = vadd.s32 %v157, %v158
    %vm162 = vcmp.lt.s32.totalorder %v159, 20
    %vm163 = vcmp.lt.s32.totalorder %v160, 20
    %vm164 = vcmp.lt.s32.totalorder %v161, 20
    %v165 = vsel %vm162, %v149, 0.0
    %v166 = vsel %vm163, %v150, 0.0
    %v167 = vsel %vm164, %v151, 0.0
    %v168 = vsel %vm162, %v83, 0.0
    %v169 = vsel %vm163, %v84, 0.0
    %v170 = vsel %vm164, %v85, 0.0
    %v171 = vld [vmem:[#allocation8] sm:$0x1]
    %v172 = vadd.f32 %v165, %v166
    %vm173 = vcmask 1043456
    %v174 = vsel %vm173, %v167, 0.0
    %v175 = vadd.f32 %v172, %v174
    %v176 = vrot.slane %v175, 4
    %v177 = vadd.f32 %v175, %v176
    %v178 = vrot.slane %v177, 2
    %v179 = vadd.f32 %v177, %v178
    %v180 = vrot.slane %v179, 1
    %v181 = vadd.f32 %v179, %v180
    %v182 = vadd.f32 %v171, %v181
    %183 = vst [vmem:[#allocation8] sm:$0x1] %v182
    %v184 = vld [vmem:[#allocation9] sm:$0x1]
    %v185 = vadd.f32 %v168, %v169
    %v186 = vsel %vm173, %v170, 0.0
    %v187 = vadd.f32 %v185, %v186
    %v188 = vrot.slane %v187, 4
    %v189 = vadd.f32 %v187, %v188
    %v190 = vrot.slane %v189, 2
    %v191 = vadd.f32 %v189, %v190
    %v192 = vrot.slane %v191, 1
    %v193 = vadd.f32 %v191, %v192
    %v194 = vadd.f32 %v184, %v193
    %195 = vst [vmem:[#allocation9] sm:$0x1] %v194
    // Predicated region
    $region30: #{tpu_custom_call.1} parent=1 // pred_check
      _
    $region31: #{tpu_custom_call.1} parent=1 // pred_check_branch
      %197 = sbr.rel (0) target = $region33
    $region32: #{tpu_custom_call.1} parent=1 // pred_region
      %s199 = ssub.s32 16, 16
      %200 = vsyncadd [#allocation4], %s199
      %s202 = sshll.u32 [#allocation8], 4
      %s203 = int_to_ptr.vmem [resolvable:$true] %s202
      %205 = dma.vmem_to_hbm [thread:$0]  %s203, 16, %s3, [#allocation4]
    $region33: #{tpu_custom_call.1} parent=1 // pred_fallthru
      _
    // Predicated region
    $region34: #{tpu_custom_call.1} parent=1 // pred_check
      _
    $region35: #{tpu_custom_call.1} parent=1 // pred_check_branch
      %207 = sbr.rel (0) target = $region37
    $region36: #{tpu_custom_call.1} parent=1 // pred_region
      %s209 = ssub.s32 16, 16
      %210 = vsyncadd [#allocation10], %s209
      %s212 = sshll.u32 [#allocation9], 4
      %s213 = int_to_ptr.vmem [resolvable:$true] %s212
      %215 = dma.vmem_to_hbm [thread:$0]  %s213, 16, %s4, [#allocation10]
    $region37: #{tpu_custom_call.1} parent=1 // pred_fallthru
      _
    // Predicated region
    $region38: #{tpu_custom_call.1} parent=1 // pred_check
      _
    $region39: #{tpu_custom_call.1} parent=1 // pred_check_branch
      %217 = sbr.rel (0) target = $region41
    $region40: #{tpu_custom_call.1} parent=1 // pred_region
      %218 = dma.done [#allocation4], 16
    $region41: #{tpu_custom_call.1} parent=1 // pred_fallthru
      _
    // Predicated region
    $region42: #{tpu_custom_call.1} parent=1 // pred_check
      _
    $region43: #{tpu_custom_call.1} parent=1 // pred_check_branch
      %220 = sbr.rel (0) target = $region45
    $region44: #{tpu_custom_call.1} parent=1 // pred_region
      %221 = dma.done [#allocation10], 16
    $region45: #{tpu_custom_call.1} parent=1 // pred_fallthru
      _
    %222 = vsyncpa [#allocation3], 1
    %223 = vsyncpa [#allocation6], 1
    %224 = vsyncpa [#allocation4], 1
    %225 = vsyncpa [#allocation10], 1

</llo_original>
